<compile_context>
chip_gen: v7x
topology: tpu7x:2x2x1
jax: 0.10.0
libtpu: 0.0.40
codegen_flags: <defaults>
</compile_context>

<pallas_src>
import jax
import jax.numpy as jnp
from jax.experimental import pallas as pl
from jax.experimental.pallas import tpu as pltpu


def memory_attention_kernel(enc_ref, dec_ref, w_enc_ref, w_dec_ref, bias_ref,
                            mem_ref, out_ref, alpha_ref):
    # enc_ref/dec_ref: (Bblk, S, D)    w_enc_ref/w_dec_ref: (D, M)
    # bias_ref: (1, M)                 mem_ref: (Bblk, M, T_SD)
    # out_ref:  (Bblk, 1, T_SD)        alpha_ref (scratch): (Bblk, 1, M) f32
    bblk = out_ref.shape[0]

    # alpha depends only on enc/dec, whose blocks do not change along the
    # S*D-tile grid axis -> compute once per batch block, keep it in scratch.
    @pl.when(pl.program_id(1) == 0)
    def _():
        for b in range(bblk):  # static unroll, Bblk is small
            # mean over seq FIRST (mean is linear), then tiny (1,D)@(D,M) dots.
            enc_mean = jnp.mean(enc_ref[b].astype(jnp.float32), axis=0,
                                keepdims=True)                        # (1, D)
            dec_mean = jnp.mean(dec_ref[b].astype(jnp.float32), axis=0,
                                keepdims=True)                        # (1, D)
            logits = (
                jnp.dot(enc_mean, w_enc_ref[...],
                        preferred_element_type=jnp.float32)
                + jnp.dot(dec_mean, w_dec_ref[...],
                          preferred_element_type=jnp.float32)
                + bias_ref[...])                                      # (1, M)
            mx = jnp.max(logits, axis=-1, keepdims=True)
            e = jnp.exp(logits - mx)
            alpha_ref[b] = e * pl.reciprocal(
                jnp.sum(e, axis=-1, keepdims=True), approx=True)

    # Weighted sum over memory slots: (1, M) @ (M, T_SD) per batch element.
    # The kernel is DMA-bound on the mem stream; the degenerate MXU shape is
    # hidden, so no special effort is spent on it.
    for b in range(bblk):  # static unroll
        alpha = alpha_ref[b].astype(mem_ref.dtype)                    # (1, M)
        out_ref[b] = jnp.dot(
            alpha, mem_ref[b],
            preferred_element_type=jnp.float32).astype(out_ref.dtype)


def _pick_tiles(B, M, SD, itemsize, target_bytes):
    """Choose (batch_block, sd_tile): ~target_bytes of short_memory per grid
    step, lane tile a multiple of 128 (or the full extent), exact divisors."""
    if SD % 128 == 0:
        divs = [d for d in range(128, SD + 1, 128) if SD % d == 0]
        fitting = [d for d in divs if M * d * itemsize <= target_bytes]
        t_sd = max(fitting) if fitting else min(divs)
    else:
        t_sd = SD  # non-128-multiple last dim must use the full extent
    bblk = 1
    for d in range(1, B + 1):
        if B % d == 0 and d * M * t_sd * itemsize <= target_bytes:
            bblk = d
    return bblk, t_sd


def memory_attention(encoder_output, decoder_output, short_memory, weight, bias,
                     *, target_block_bytes=2 * 1024 * 1024):
    """encoder_output/decoder_output: (B, S, D); short_memory: (B, M, S, D);
    weight: (M, 2*D) (PyTorch Linear layout); bias: (M,). Returns (B, S, D)."""
    B, S, D = encoder_output.shape
    M = weight.shape[0]
    assert weight.shape == (M, 2 * D)
    assert short_memory.shape == (B, M, S, D)
    SD = S * D

    # Split the Linear weight so the kernel avoids an in-kernel concat.
    # Weights/bias are tiny -> keep them in f32 for the alpha math.
    w_enc = weight[:, :D].T.astype(jnp.float32)   # (D, M)
    w_dec = weight[:, D:].T.astype(jnp.float32)   # (D, M)
    bias2d = bias.reshape(1, M).astype(jnp.float32)

    # Keep the dominant HBM stream in its native dtype (no f32 upcast).
    mem_flat = short_memory.reshape(B, M, SD)
    out_dtype = short_memory.dtype

    bblk, t_sd = _pick_tiles(B, M, SD, mem_flat.dtype.itemsize,
                             target_block_bytes)
    grid = (B // bblk, SD // t_sd)

    out_flat = pl.pallas_call(
        memory_attention_kernel,
        out_shape=jax.ShapeDtypeStruct((B, 1, SD), out_dtype),
        grid_spec=pltpu.PrefetchScalarGridSpec(
            num_scalar_prefetch=0,
            grid=grid,
            in_specs=[
                pl.BlockSpec((bblk, S, D), lambda b, t: (b, 0, 0)),     # enc
                pl.BlockSpec((bblk, S, D), lambda b, t: (b, 0, 0)),     # dec
                pl.BlockSpec((D, M), lambda b, t: (0, 0)),              # W_enc
                pl.BlockSpec((D, M), lambda b, t: (0, 0)),              # W_dec
                pl.BlockSpec((1, M), lambda b, t: (0, 0)),              # bias
                pl.BlockSpec((bblk, M, t_sd), lambda b, t: (b, 0, t)),  # memory
            ],
            out_specs=pl.BlockSpec((bblk, 1, t_sd), lambda b, t: (b, 0, t)),
            scratch_shapes=[pltpu.VMEM((bblk, 1, M), jnp.float32)],     # alpha
        ),
        compiler_params=pltpu.CompilerParams(
            # batch axis parallel (megacore); the S*D-tile axis stays
            # 'arbitrary' so the alpha scratch computed at tile 0 is visible
            # for the remaining tiles of the same batch block.
            dimension_semantics=("parallel", "arbitrary")),
    )(encoder_output, decoder_output, w_enc, w_dec, bias2d, mem_flat)

    return out_flat.reshape(B, S, D)


def memory_attention_ref(encoder_output, decoder_output, short_memory, weight, bias):
    # Pure-JAX reference matching the PyTorch forward exactly.
    combined = jnp.concatenate([encoder_output, decoder_output], axis=2) @ weight.T + bias
    alpha = jax.nn.softmax(jnp.mean(combined, axis=1), axis=1)          # (B, M)
    weighted = short_memory * alpha[:, :, None, None]                   # (B, M, S, D)
    return jnp.sum(weighted, axis=1)                                    # (B, S, D)


if __name__ == "__main__":
    B, S, D, M = 2, 8, 32, 5   # batch, seq, dim_model, memory_size

    key = jax.random.PRNGKey(0)
    k_enc, k_dec, k_mem, k_w, k_b = jax.random.split(key, 5)

    encoder_output = jax.random.normal(k_enc, (B, S, D), dtype=jnp.float32)
    decoder_output = jax.random.normal(k_dec, (B, S, D), dtype=jnp.float32)
    short_memory = jax.random.normal(k_mem, (B, M, S, D), dtype=jnp.float32)

    # Deterministic Linear(dim_model*2 -> memory_size) params (PyTorch-style bound).
    bound = 1.0 / jnp.sqrt(2.0 * D)
    weight = jax.random.uniform(k_w, (M, 2 * D), minval=-bound, maxval=bound,
                                dtype=jnp.float32)
    bias = jax.random.uniform(k_b, (M,), minval=-bound, maxval=bound,
                              dtype=jnp.float32)

    out = memory_attention(encoder_output, decoder_output, short_memory,
                           weight, bias)
    out = jax.block_until_ready(out)

    ref = memory_attention_ref(encoder_output, decoder_output, short_memory,
                               weight, bias)
    assert out.shape == (B, S, D)
    # approx-reciprocal softmax denominator + mean re-association => slightly
    # looser tolerance than the exact-f32 reference.
    assert jnp.allclose(out, ref.astype(out.dtype), atol=5e-3, rtol=5e-3), \
        "mismatch vs reference"

    print("KERNEL_OK")
</pallas_src>

<mosaic_0001>
module attributes {stable_mosaic.version = 11 : i64} {
  func.func @memory_attention_kernel(%arg0: i32, %arg1: i32, %arg2: memref<2x8x32xf32, #tpu.memory_space<vmem>>, %arg3: memref<2x8x32xf32, #tpu.memory_space<vmem>>, %arg4: memref<32x5xf32, #tpu.memory_space<vmem>>, %arg5: memref<32x5xf32, #tpu.memory_space<vmem>>, %arg6: memref<1x5xf32, #tpu.memory_space<vmem>>, %arg7: memref<2x5x256xf32, #tpu.memory_space<vmem>>, %arg8: memref<2x1x256xf32, #tpu.memory_space<vmem>>, %arg9: memref<2x1x5xf32, #tpu.memory_space<vmem>>) attributes {dimension_semantics = [#tpu.dimension_semantics<parallel>, #tpu.dimension_semantics<arbitrary>], iteration_bounds = array<i64: 1, 1>, scalar_prefetch = 0 : i64, scratch_operands = 1 : i64, tpu.core_type = #tpu.core_type<tc>, window_params = [{transform_indices = @transform_0, window_bounds = array<i64: 2, 8, 32>}, {transform_indices = @transform_1, window_bounds = array<i64: 2, 8, 32>}, {pipeline_mode = #tpu.pipeline_mode<synchronous>, transform_indices = @transform_2, window_bounds = array<i64: 32, 5>}, {pipeline_mode = #tpu.pipeline_mode<synchronous>, transform_indices = @transform_3, window_bounds = array<i64: 32, 5>}, {pipeline_mode = #tpu.pipeline_mode<synchronous>, transform_indices = @transform_4, window_bounds = array<i64: 1, 5>}, {transform_indices = @transform_5, window_bounds = array<i64: 2, 5, 256>}, {transform_indices = @transform_6, window_bounds = array<i64: 2, 1, 256>}]} {
    %c0_i32 = arith.constant 0 : i32
    %0 = arith.cmpi eq, %arg1, %c0_i32 : i32
    %1 = arith.extui %0 : i1 to i32
    %c0_i32_0 = arith.constant 0 : i32
    %2 = arith.cmpi ne, %1, %c0_i32_0 : i32
    scf.if %2 {
      %c0_18 = arith.constant 0 : index
      %c0_19 = arith.constant 0 : index
      %c0_20 = arith.constant 0 : index
      %19 = vector.load %arg2[%c0_18, %c0_19, %c0_20] : memref<2x8x32xf32, #tpu.memory_space<vmem>>, vector<1x8x32xf32>
      %20 = vector.shape_cast %19 : vector<1x8x32xf32> to vector<8x32xf32>
      %cst_21 = arith.constant dense<0.000000e+00> : vector<32xf32>
      %21 = vector.multi_reduction <add>, %20, %cst_21 [0] : vector<8x32xf32> to vector<32xf32>
      %22 = vector.shape_cast %21 : vector<32xf32> to vector<1x32xf32>
      %cst_22 = arith.constant 8.000000e+00 : f32
      %23 = vector.broadcast %cst_22 : f32 to vector<1x32xf32>
      %24 = arith.divf %22, %23 : vector<1x32xf32>
      %c0_23 = arith.constant 0 : index
      %c0_24 = arith.constant 0 : index
      %c0_25 = arith.constant 0 : index
      %25 = vector.load %arg3[%c0_23, %c0_24, %c0_25] : memref<2x8x32xf32, #tpu.memory_space<vmem>>, vector<1x8x32xf32>
      %26 = vector.shape_cast %25 : vector<1x8x32xf32> to vector<8x32xf32>
      %cst_26 = arith.constant dense<0.000000e+00> : vector<32xf32>
      %27 = vector.multi_reduction <add>, %26, %cst_26 [0] : vector<8x32xf32> to vector<32xf32>
      %28 = vector.shape_cast %27 : vector<32xf32> to vector<1x32xf32>
      %cst_27 = arith.constant 8.000000e+00 : f32
      %29 = vector.broadcast %cst_27 : f32 to vector<1x32xf32>
      %30 = arith.divf %28, %29 : vector<1x32xf32>
      %c0_28 = arith.constant 0 : index
      %c0_29 = arith.constant 0 : index
      %31 = vector.load %arg4[%c0_28, %c0_29] : memref<32x5xf32, #tpu.memory_space<vmem>>, vector<32x5xf32>
      %cst_30 = arith.constant dense<0.000000e+00> : vector<1x5xf32>
      %32 = tpu.matmul %24, %31, %cst_30 {dimension_numbers = #tpu.dot_dimension_numbers<[1], [0], [0], [1], [0, 0, 1, 1], [], []>} : vector<1x32xf32>, vector<32x5xf32>, vector<1x5xf32> -> vector<1x5xf32>
      %c0_31 = arith.constant 0 : index
      %c0_32 = arith.constant 0 : index
      %33 = vector.load %arg5[%c0_31, %c0_32] : memref<32x5xf32, #tpu.memory_space<vmem>>, vector<32x5xf32>
      %cst_33 = arith.constant dense<0.000000e+00> : vector<1x5xf32>
      %34 = tpu.matmul %30, %33, %cst_33 {dimension_numbers = #tpu.dot_dimension_numbers<[1], [0], [0], [1], [0, 0, 1, 1], [], []>} : vector<1x32xf32>, vector<32x5xf32>, vector<1x5xf32> -> vector<1x5xf32>
      %35 = arith.addf %32, %34 : vector<1x5xf32>
      %c0_34 = arith.constant 0 : index
      %c0_35 = arith.constant 0 : index
      %36 = vector.load %arg6[%c0_34, %c0_35] : memref<1x5xf32, #tpu.memory_space<vmem>>, vector<1x5xf32>
      %37 = arith.addf %35, %36 : vector<1x5xf32>
      %cst_36 = arith.constant dense<0xFF800000> : vector<1xf32>
      %38 = vector.multi_reduction <maximumf>, %37, %cst_36 [1] : vector<1x5xf32> to vector<1xf32>
      %39 = vector.shape_cast %38 : vector<1xf32> to vector<1x1xf32>
      %40 = vector.broadcast %39 : vector<1x1xf32> to vector<1x5xf32>
      %41 = arith.subf %37, %40 : vector<1x5xf32>
      %42 = math.exp %41 : vector<1x5xf32>
      %cst_37 = arith.constant dense<0.000000e+00> : vector<1xf32>
      %43 = vector.multi_reduction <add>, %42, %cst_37 [1] : vector<1x5xf32> to vector<1xf32>
      %44 = vector.shape_cast %43 : vector<1xf32> to vector<1x1xf32>
      %45 = tpu.reciprocal %44 {approx = true} : vector<1x1xf32> -> vector<1x1xf32>
      %46 = vector.broadcast %45 : vector<1x1xf32> to vector<1x5xf32>
      %47 = arith.mulf %42, %46 : vector<1x5xf32>
      %c0_38 = arith.constant 0 : index
      %c0_39 = arith.constant 0 : index
      %c0_40 = arith.constant 0 : index
      %48 = vector.load %arg9[%c0_38, %c0_39, %c0_40] : memref<2x1x5xf32, #tpu.memory_space<vmem>>, vector<1x1x5xf32>
      %49 = vector.shape_cast %48 : vector<1x1x5xf32> to vector<1x5xf32>
      %50 = vector.shape_cast %47 : vector<1x5xf32> to vector<1x1x5xf32>
      tpu.vector_store %arg9[%c0_38, %c0_39, %c0_40], %50 {strides = array<i32>} : memref<2x1x5xf32, #tpu.memory_space<vmem>>, vector<1x1x5xf32>,
      %c1_41 = arith.constant 1 : index
      %c0_42 = arith.constant 0 : index
      %c0_43 = arith.constant 0 : index
      %51 = vector.load %arg2[%c1_41, %c0_42, %c0_43] : memref<2x8x32xf32, #tpu.memory_space<vmem>>, vector<1x8x32xf32>
      %52 = vector.shape_cast %51 : vector<1x8x32xf32> to vector<8x32xf32>
      %cst_44 = arith.constant dense<0.000000e+00> : vector<32xf32>
      %53 = vector.multi_reduction <add>, %52, %cst_44 [0] : vector<8x32xf32> to vector<32xf32>
      %54 = vector.shape_cast %53 : vector<32xf32> to vector<1x32xf32>
      %cst_45 = arith.constant 8.000000e+00 : f32
      %55 = vector.broadcast %cst_45 : f32 to vector<1x32xf32>
      %56 = arith.divf %54, %55 : vector<1x32xf32>
      %c1_46 = arith.constant 1 : index
      %c0_47 = arith.constant 0 : index
      %c0_48 = arith.constant 0 : index
      %57 = vector.load %arg3[%c1_46, %c0_47, %c0_48] : memref<2x8x32xf32, #tpu.memory_space<vmem>>, vector<1x8x32xf32>
      %58 = vector.shape_cast %57 : vector<1x8x32xf32> to vector<8x32xf32>
      %cst_49 = arith.constant dense<0.000000e+00> : vector<32xf32>
      %59 = vector.multi_reduction <add>, %58, %cst_49 [0] : vector<8x32xf32> to vector<32xf32>
      %60 = vector.shape_cast %59 : vector<32xf32> to vector<1x32xf32>
      %cst_50 = arith.constant 8.000000e+00 : f32
      %61 = vector.broadcast %cst_50 : f32 to vector<1x32xf32>
      %62 = arith.divf %60, %61 : vector<1x32xf32>
      %c0_51 = arith.constant 0 : index
      %c0_52 = arith.constant 0 : index
      %63 = vector.load %arg4[%c0_51, %c0_52] : memref<32x5xf32, #tpu.memory_space<vmem>>, vector<32x5xf32>
      %cst_53 = arith.constant dense<0.000000e+00> : vector<1x5xf32>
      %64 = tpu.matmul %56, %63, %cst_53 {dimension_numbers = #tpu.dot_dimension_numbers<[1], [0], [0], [1], [0, 0, 1, 1], [], []>} : vector<1x32xf32>, vector<32x5xf32>, vector<1x5xf32> -> vector<1x5xf32>
      %c0_54 = arith.constant 0 : index
      %c0_55 = arith.constant 0 : index
      %65 = vector.load %arg5[%c0_54, %c0_55] : memref<32x5xf32, #tpu.memory_space<vmem>>, vector<32x5xf32>
      %cst_56 = arith.constant dense<0.000000e+00> : vector<1x5xf32>
      %66 = tpu.matmul %62, %65, %cst_56 {dimension_numbers = #tpu.dot_dimension_numbers<[1], [0], [0], [1], [0, 0, 1, 1], [], []>} : vector<1x32xf32>, vector<32x5xf32>, vector<1x5xf32> -> vector<1x5xf32>
      %67 = arith.addf %64, %66 : vector<1x5xf32>
      %c0_57 = arith.constant 0 : index
      %c0_58 = arith.constant 0 : index
      %68 = vector.load %arg6[%c0_57, %c0_58] : memref<1x5xf32, #tpu.memory_space<vmem>>, vector<1x5xf32>
      %69 = arith.addf %67, %68 : vector<1x5xf32>
      %cst_59 = arith.constant dense<0xFF800000> : vector<1xf32>
      %70 = vector.multi_reduction <maximumf>, %69, %cst_59 [1] : vector<1x5xf32> to vector<1xf32>
      %71 = vector.shape_cast %70 : vector<1xf32> to vector<1x1xf32>
      %72 = vector.broadcast %71 : vector<1x1xf32> to vector<1x5xf32>
      %73 = arith.subf %69, %72 : vector<1x5xf32>
      %74 = math.exp %73 : vector<1x5xf32>
      %cst_60 = arith.constant dense<0.000000e+00> : vector<1xf32>
      %75 = vector.multi_reduction <add>, %74, %cst_60 [1] : vector<1x5xf32> to vector<1xf32>
      %76 = vector.shape_cast %75 : vector<1xf32> to vector<1x1xf32>
      %77 = tpu.reciprocal %76 {approx = true} : vector<1x1xf32> -> vector<1x1xf32>
      %78 = vector.broadcast %77 : vector<1x1xf32> to vector<1x5xf32>
      %79 = arith.mulf %74, %78 : vector<1x5xf32>
      %c1_61 = arith.constant 1 : index
      %c0_62 = arith.constant 0 : index
      %c0_63 = arith.constant 0 : index
      %80 = vector.load %arg9[%c1_61, %c0_62, %c0_63] : memref<2x1x5xf32, #tpu.memory_space<vmem>>, vector<1x1x5xf32>
      %81 = vector.shape_cast %80 : vector<1x1x5xf32> to vector<1x5xf32>
      %82 = vector.shape_cast %79 : vector<1x5xf32> to vector<1x1x5xf32>
      tpu.vector_store %arg9[%c1_61, %c0_62, %c0_63], %82 {strides = array<i32>} : memref<2x1x5xf32, #tpu.memory_space<vmem>>, vector<1x1x5xf32>,
    } else {
    }
    %c0 = arith.constant 0 : index
    %c0_1 = arith.constant 0 : index
    %c0_2 = arith.constant 0 : index
    %3 = vector.load %arg9[%c0, %c0_1, %c0_2] : memref<2x1x5xf32, #tpu.memory_space<vmem>>, vector<1x1x5xf32>
    %4 = vector.shape_cast %3 : vector<1x1x5xf32> to vector<1x5xf32>
    %c0_3 = arith.constant 0 : index
    %c0_4 = arith.constant 0 : index
    %c0_5 = arith.constant 0 : index
    %5 = vector.load %arg7[%c0_3, %c0_4, %c0_5] : memref<2x5x256xf32, #tpu.memory_space<vmem>>, vector<1x5x256xf32>
    %6 = vector.shape_cast %5 : vector<1x5x256xf32> to vector<5x256xf32>
    %cst = arith.constant dense<0.000000e+00> : vector<1x256xf32>
    %7 = tpu.matmul %4, %6, %cst {dimension_numbers = #tpu.dot_dimension_numbers<[1], [0], [0], [1], [0, 0, 1, 1], [], []>} : vector<1x5xf32>, vector<5x256xf32>, vector<1x256xf32> -> vector<1x256xf32>
    %c0_6 = arith.constant 0 : index
    %c0_7 = arith.constant 0 : index
    %c0_8 = arith.constant 0 : index
    %8 = vector.load %arg8[%c0_6, %c0_7, %c0_8] : memref<2x1x256xf32, #tpu.memory_space<vmem>>, vector<1x1x256xf32>
    %9 = vector.shape_cast %8 : vector<1x1x256xf32> to vector<1x256xf32>
    %10 = vector.shape_cast %7 : vector<1x256xf32> to vector<1x1x256xf32>
    tpu.vector_store %arg8[%c0_6, %c0_7, %c0_8], %10 {strides = array<i32>} : memref<2x1x256xf32, #tpu.memory_space<vmem>>, vector<1x1x256xf32>,
    %c1 = arith.constant 1 : index
    %c0_9 = arith.constant 0 : index
    %c0_10 = arith.constant 0 : index
    %11 = vector.load %arg9[%c1, %c0_9, %c0_10] : memref<2x1x5xf32, #tpu.memory_space<vmem>>, vector<1x1x5xf32>
    %12 = vector.shape_cast %11 : vector<1x1x5xf32> to vector<1x5xf32>
    %c1_11 = arith.constant 1 : index
    %c0_12 = arith.constant 0 : index
    %c0_13 = arith.constant 0 : index
    %13 = vector.load %arg7[%c1_11, %c0_12, %c0_13] : memref<2x5x256xf32, #tpu.memory_space<vmem>>, vector<1x5x256xf32>
    %14 = vector.shape_cast %13 : vector<1x5x256xf32> to vector<5x256xf32>
    %cst_14 = arith.constant dense<0.000000e+00> : vector<1x256xf32>
    %15 = tpu.matmul %12, %14, %cst_14 {dimension_numbers = #tpu.dot_dimension_numbers<[1], [0], [0], [1], [0, 0, 1, 1], [], []>} : vector<1x5xf32>, vector<5x256xf32>, vector<1x256xf32> -> vector<1x256xf32>
    %c1_15 = arith.constant 1 : index
    %c0_16 = arith.constant 0 : index
    %c0_17 = arith.constant 0 : index
    %16 = vector.load %arg8[%c1_15, %c0_16, %c0_17] : memref<2x1x256xf32, #tpu.memory_space<vmem>>, vector<1x1x256xf32>
    %17 = vector.shape_cast %16 : vector<1x1x256xf32> to vector<1x256xf32>
    %18 = vector.shape_cast %15 : vector<1x256xf32> to vector<1x1x256xf32>
    tpu.vector_store %arg8[%c1_15, %c0_16, %c0_17], %18 {strides = array<i32>} : memref<2x1x256xf32, #tpu.memory_space<vmem>>, vector<1x1x256xf32>,
    return
  }
  func.func @transform_0(%arg0: i32, %arg1: i32) -> (i32, i32, i32) {
    %c0_i32 = arith.constant 0 : i32
    %c0_i32_0 = arith.constant 0 : i32
    %c0_i32_1 = arith.constant 0 : i32
    return %arg0, %c0_i32, %c0_i32_0 : i32, i32, i32
  }
  func.func @transform_1(%arg0: i32, %arg1: i32) -> (i32, i32, i32) {
    %c0_i32 = arith.constant 0 : i32
    %c0_i32_0 = arith.constant 0 : i32
    %c0_i32_1 = arith.constant 0 : i32
    return %arg0, %c0_i32, %c0_i32_0 : i32, i32, i32
  }
  func.func @transform_2(%arg0: i32, %arg1: i32) -> (i32, i32) {
    %c0_i32 = arith.constant 0 : i32
    %c0_i32_0 = arith.constant 0 : i32
    %c0_i32_1 = arith.constant 0 : i32
    return %c0_i32, %c0_i32_0 : i32, i32
  }
  func.func @transform_3(%arg0: i32, %arg1: i32) -> (i32, i32) {
    %c0_i32 = arith.constant 0 : i32
    %c0_i32_0 = arith.constant 0 : i32
    %c0_i32_1 = arith.constant 0 : i32
    return %c0_i32, %c0_i32_0 : i32, i32
  }
  func.func @transform_4(%arg0: i32, %arg1: i32) -> (i32, i32) {
    %c0_i32 = arith.constant 0 : i32
    %c0_i32_0 = arith.constant 0 : i32
    %c0_i32_1 = arith.constant 0 : i32
    return %c0_i32, %c0_i32_0 : i32, i32
  }
  func.func @transform_5(%arg0: i32, %arg1: i32) -> (i32, i32, i32) {
    %c0_i32 = arith.constant 0 : i32
    %c0_i32_0 = arith.constant 0 : i32
    return %arg0, %c0_i32, %arg1 : i32, i32, i32
  }
  func.func @transform_6(%arg0: i32, %arg1: i32) -> (i32, i32, i32) {
    %c0_i32 = arith.constant 0 : i32
    %c0_i32_0 = arith.constant 0 : i32
    return %arg0, %c0_i32, %arg1 : i32, i32, i32
  }
}

</mosaic_0001>

<llo_original>
// kernel: tpu_custom_call.1
$region0: #{tpu_custom_call.1}
  #allocation0 [shape = 'u32[]', space=smem, size = 0x4, offset = 0x4, fixed_abs, tag = 'smem constant byte address 0x4 - core index']
  #allocation1 [shape = 'u32[144,128]{1,0:T(1,128)}', space=vmem, size = 0x12000, scoped, tag = 'internal scratch']
  #allocation2 [shape = 'f32[2,1,5]{2,1,0:T(1,128)}', space=vmem, size = 0x400, scoped, tag = 'scratch operand']
  %s0 = inlined_call_operand.vmem [shape: f32[2,8,32], index: 0, kind: input, shape index: {}]
  %s1 = inlined_call_operand.vmem [shape: f32[2,8,32], index: 1, kind: input, shape index: {}]
  %s2 = inlined_call_operand.vmem [shape: f32[32,5], index: 2, kind: input, shape index: {}]
  %s3 = inlined_call_operand.vmem [shape: f32[32,5], index: 3, kind: input, shape index: {}]
  %s4 = inlined_call_operand.vmem [shape: f32[1,5], index: 4, kind: input, shape index: {}]
  %s5 = inlined_call_operand.vmem [shape: f32[2,5,256], index: 5, kind: input, shape index: {}]
  %s6 = inlined_call_operand.hbm [shape: f32[2,1,256], index: 6, kind: output, shape index: {}]
  %s7 = sld [smem:[#allocation0]]
  $region38: #{tpu_custom_call.1} parent=0
    _
  %s9 = ssub.s32 1, %s7
  %s10 = scalar_select 0, %s9, %s7
  $region1: #{tpu_custom_call.1} parent=0
    #allocation3 [shape = 'u8[2048]{0}', space=vmem, size = 0x800, scoped, tag = 'output window, operand 0, single buffered']
    #allocation4 [shape = 's32[1]{0}', space=sflag, size = 0x4, scoped, tag = 'scoped memory for tpu_custom_call.1']
    %11 = vsyncpa [#allocation4], 0
    // Predicated region
    $region2: #{tpu_custom_call.1} parent=1 // pred_check
      _
    $region3: #{tpu_custom_call.1} parent=1 // pred_check_branch
      %13 = sbr.rel (0) target = $region5
    $region4: #{tpu_custom_call.1} parent=1 // pred_region
      _
    $region5: #{tpu_custom_call.1} parent=1 // pred_fallthru
      _
    // Predicated region
    $region6: #{tpu_custom_call.1} parent=1 // pred_check
      _
    $region7: #{tpu_custom_call.1} parent=1 // pred_check_branch
      %15 = sbr.rel (0) target = $region9
    $region8: #{tpu_custom_call.1} parent=1 // pred_region
      _
    $region9: #{tpu_custom_call.1} parent=1 // pred_fallthru
      _
    // Predicated region
    $region10: #{tpu_custom_call.1} parent=1 // pred_check
      _
    $region11: #{tpu_custom_call.1} parent=1 // pred_check_branch
      %17 = sbr.rel (0) target = $region13
    $region12: #{tpu_custom_call.1} parent=1 // pred_region
      _
    $region13: #{tpu_custom_call.1} parent=1 // pred_fallthru
      _
    // Predicated region
    $region14: #{tpu_custom_call.1} parent=1 // pred_check
      _
    $region15: #{tpu_custom_call.1} parent=1 // pred_check_branch
      %19 = sbr.rel (0) target = $region17
    $region16: #{tpu_custom_call.1} parent=1 // pred_region
      _
    $region17: #{tpu_custom_call.1} parent=1 // pred_fallthru
      _
    // Predicated region
    $region18: #{tpu_custom_call.1} parent=1 // pred_check
      _
    $region19: #{tpu_custom_call.1} parent=1 // pred_check_branch
      %21 = sbr.rel (0) target = $region21
    $region20: #{tpu_custom_call.1} parent=1 // pred_region
      _
    $region21: #{tpu_custom_call.1} parent=1 // pred_fallthru
      _
    // Predicated region
    $region22: #{tpu_custom_call.1} parent=1 // pred_check
      _
    $region23: #{tpu_custom_call.1} parent=1 // pred_check_branch
      %23 = sbr.rel (0) target = $region25
    $region24: #{tpu_custom_call.1} parent=1 // pred_region
      _
    $region25: #{tpu_custom_call.1} parent=1 // pred_fallthru
      _
    %p24 = scmp.eq.s32.totalorder 0, 0
    // Predicated region
    $region26: #{tpu_custom_call.1} parent=1 // pred_check
      %p25 = pneg %p24
    $region27: #{tpu_custom_call.1} parent=1 // pred_check_branch
      %27 = sbr.rel (%p25) target = $region29
    $region28: #{tpu_custom_call.1} parent=1 // pred_region
      %v28 = vld [vmem:[%s0] sm:$0xff]
      %vm29 = vcmask 261120
      %v30 = vsel %vm29, %v28, 0.0
      %v31 = vrot.slane %v30, 4
      %v32 = vadd.f32 %v30, %v31
      %v33 = vrot.slane %v32, 2
      %v34 = vadd.f32 %v32, %v33
      %v35 = vrot.slane %v34, 1
      %v36 = vadd.f32 %v34, %v35
      %v37 = vrcp.pop 8.0
      %v38 = vmul.f32 %v36, %v37
      %v39 = vld [vmem:[%s1] sm:$0xff]
      %v40 = vsel %vm29, %v39, 0.0
      %v41 = vrot.slane %v40, 4
      %v42 = vadd.f32 %v40, %v41
      %v43 = vrot.slane %v42, 2
      %v44 = vadd.f32 %v42, %v43
      %v45 = vrot.slane %v44, 1
      %v46 = vadd.f32 %v44, %v45
      %v47 = vmul.f32 %v46, %v37
      %v48 = vld [vmem:[%s2] sm:$0xff]
      %v49 = vld [vmem:[%s2 + $0x8] sm:$0xff]
      %v50 = vld [vmem:[%s2 + $0x10] sm:$0xff]
      %v51 = vld [vmem:[%s2 + $0x18] sm:$0xff]
      %v52 = vld [vmem:[%s3] sm:$0xff]
      %v53 = vld [vmem:[%s3 + $0x8] sm:$0xff]
      %v54 = vld [vmem:[%s3 + $0x10] sm:$0xff]
      %v55 = vld [vmem:[%s3 + $0x18] sm:$0xff]
      %v57 = vsel %vm29, %v47, 0
      %59 = vmatprep.subr.mxu0 0.0
      %60 = vmatpush1.msra.mxu0 %v52
      %61 = vmatprep.subr.mxu0 0.0
      %62 = vmatpush1.msra.mxu0 %v53
      %63 = vmatprep.subr.mxu0 0.0
      %64 = vmatpush1.msra.mxu0 %v54
      %65 = vmatprep.subr.mxu0 0.0
      %66 = vmatpush1.msra.mxu0 %v55
      %67 = vmatprep.subr.mxu0 0.0
      %68 = vmatpush1.msra.mxu0 0.0
      %69 = vmatprep.subr.mxu0 0.0
      %70 = vmatpush1.msra.mxu0 0.0
      %71 = vmatprep.subr.mxu0 0.0
      %72 = vmatpush1.msra.mxu0 0.0
      %73 = vmatprep.subr.mxu0 0.0
      %74 = vmatpush1.msra.mxu0 0.0
      %75 = vmatprep.subr.mxu0 0.0
      %76 = vmatpush1.msra.mxu0 0.0
      %77 = vmatprep.subr.mxu0 0.0
      %78 = vmatpush1.msra.mxu0 0.0
      %79 = vmatprep.subr.mxu0 0.0
      %80 = vmatpush1.msra.mxu0 0.0
      %81 = vmatprep.subr.mxu0 0.0
      %82 = vmatpush1.msra.mxu0 0.0
      %83 = vmatprep.subr.mxu0 0.0
      %84 = vmatpush1.msra.mxu0 0.0
      %85 = vmatprep.subr.mxu0 0.0
      %86 = vmatpush1.msra.mxu0 0.0
      %87 = vmatprep.subr.mxu0 0.0
      %88 = vmatpush1.msra.mxu0 0.0
      %89 = vmatprep.subr.mxu0 0.0
      %90 = vmatpush1.msra.mxu0 0.0
      %91 = vmatprep.subr.mxu0 0.0
      %92 = vmatpush1.msra.mxu0 0.0
      %93 = vmatprep.subr.mxu0 0.0
      %94 = vmatpush1.msra.mxu0 0.0
      %95 = vmatprep.subr.mxu0 0.0
      %96 = vmatpush1.msra.mxu0 0.0
      %97 = vmatprep.subr.mxu0 0.0
      %98 = vmatpush1.msra.mxu0 0.0
      %99 = vmatprep.subr.mxu0 0.0
      %100 = vmatpush1.msra.mxu0 0.0
      %101 = vmatprep.subr.mxu0 0.0
      %102 = vmatpush1.msra.mxu0 0.0
      %103 = vmatprep.subr.mxu0 0.0
      %104 = vmatpush1.msra.mxu0 0.0
      %105 = vmatprep.subr.mxu0 0.0
      %106 = vmatpush1.msra.mxu0 0.0
      %107 = vmatprep.subr.mxu0 0.0
      %108 = vmatpush1.msra.mxu0 0.0
      %109 = vmatprep.subr.mxu0 0.0
      %110 = vmatpush1.msra.mxu0 0.0
      %111 = vmatprep.subr.mxu0 0.0
      %112 = vmatpush1.msra.mxu0 0.0
      %113 = vmatprep.subr.mxu0 0.0
      %114 = vmatpush1.msra.mxu0 0.0
      %115 = vmatprep.subr.mxu0 0.0
      %116 = vmatpush1.msra.mxu0 0.0
      %117 = vmatprep.subr.mxu0 0.0
      %118 = vmatpush1.msra.mxu0 0.0
      %119 = vmatprep.subr.mxu0 0.0
      %120 = vmatpush1.msra.mxu0 0.0
      %121 = vmatprep.subr.mxu0 0.0
      %122 = vmatpush1.msra.mxu0 0.0
      %123 = vmatprep.mubr.f32.mxu0 0.0
      %124 = vmatmul.mubr.f32.gmra.mrb[0].mxu0 %v57
      %v125 = vpop.f32.mrb[0].mxu0
      %v126 = vadd.f32 0.0, %v125
      %v127 = vpop.f32.mrb[0].mxu0
      %128 = vdwg.mxu0
      %v130 = vsel %vm29, %v38, 0
      %132 = vmatprep.subr.mxu0 0.0
      %133 = vmatpush1.msra.mxu0 %v48
      %134 = vmatprep.subr.mxu0 0.0
      %135 = vmatpush1.msra.mxu0 %v49
      %136 = vmatprep.subr.mxu0 0.0
      %137 = vmatpush1.msra.mxu0 %v50
      %138 = vmatprep.subr.mxu0 0.0
      %139 = vmatpush1.msra.mxu0 %v51
      %140 = vmatprep.subr.mxu0 0.0
      %141 = vmatpush1.msra.mxu0 0.0
      %142 = vmatprep.subr.mxu0 0.0
      %143 = vmatpush1.msra.mxu0 0.0
      %144 = vmatprep.subr.mxu0 0.0
      %145 = vmatpush1.msra.mxu0 0.0
      %146 = vmatprep.subr.mxu0 0.0
      %147 = vmatpush1.msra.mxu0 0.0
      %148 = vmatprep.subr.mxu0 0.0
      %149 = vmatpush1.msra.mxu0 0.0
      %150 = vmatprep.subr.mxu0 0.0
      %151 = vmatpush1.msra.mxu0 0.0
      %152 = vmatprep.subr.mxu0 0.0
      %153 = vmatpush1.msra.mxu0 0.0
      %154 = vmatprep.subr.mxu0 0.0
      %155 = vmatpush1.msra.mxu0 0.0
      %156 = vmatprep.subr.mxu0 0.0
      %157 = vmatpush1.msra.mxu0 0.0
      %158 = vmatprep.subr.mxu0 0.0
      %159 = vmatpush1.msra.mxu0 0.0
      %160 = vmatprep.subr.mxu0 0.0
      %161 = vmatpush1.msra.mxu0 0.0
      %162 = vmatprep.subr.mxu0 0.0
      %163 = vmatpush1.msra.mxu0 0.0
      %164 = vmatprep.subr.mxu0 0.0
      %165 = vmatpush1.msra.mxu0 0.0
      %166 = vmatprep.subr.mxu0 0.0
      %167 = vmatpush1.msra.mxu0 0.0
      %168 = vmatprep.subr.mxu0 0.0
      %169 = vmatpush1.msra.mxu0 0.0
      %170 = vmatprep.subr.mxu0 0.0
      %171 = vmatpush1.msra.mxu0 0.0
      %172 = vmatprep.subr.mxu0 0.0
      %173 = vmatpush1.msra.mxu0 0.0
      %174 = vmatprep.subr.mxu0 0.0
      %175 = vmatpush1.msra.mxu0 0.0
      %176 = vmatprep.subr.mxu0 0.0
      %177 = vmatpush1.msra.mxu0 0.0
      %178 = vmatprep.subr.mxu0 0.0
      %179 = vmatpush1.msra.mxu0 0.0
      %180 = vmatprep.subr.mxu0 0.0
      %181 = vmatpush1.msra.mxu0 0.0
      %182 = vmatprep.subr.mxu0 0.0
      %183 = vmatpush1.msra.mxu0 0.0
      %184 = vmatprep.subr.mxu0 0.0
      %185 = vmatpush1.msra.mxu0 0.0
      %186 = vmatprep.subr.mxu0 0.0
      %187 = vmatpush1.msra.mxu0 0.0
      %188 = vmatprep.subr.mxu0 0.0
      %189 = vmatpush1.msra.mxu0 0.0
      %190 = vmatprep.subr.mxu0 0.0
      %191 = vmatpush1.msra.mxu0 0.0
      %192 = vmatprep.subr.mxu0 0.0
      %193 = vmatpush1.msra.mxu0 0.0
      %194 = vmatprep.subr.mxu0 0.0
      %195 = vmatpush1.msra.mxu0 0.0
      %196 = vmatprep.mubr.f32.mxu0 0.0
      %197 = vmatmul.mubr.f32.gmra.mrb[0].mxu0 %v130
      %v198 = vpop.f32.mrb[0].mxu0
      %v199 = vadd.f32 %v126, %v198
      %v200 = vpop.f32.mrb[0].mxu0
      %201 = vdwg.mxu0
      %v202 = vld [vmem:[%s4] sm:$0x1]
      %v203 = vadd.f32 %v199, %v202
      %vm204 = vcmask 32768
      %v205 = vsel %vm204, %v203, -inf
      %206 = vmax.xlane.f32.xlu0 %v205
      %v207 = vpop.xlane.xlu0 %206
      %v208 = vsub.f32 %v203, %v207
      %v209 = vmul.f32 %v208, 1.442695
      %v210 = vpow.pop %v209
      %v211 = vsel %vm204, %v210, 0.0
      %212 = vadd.xlane.f32.xlu0 %v211
      %v213 = vpop.xlane.xlu0 %212
      %v214 = vrcp.pop %v213
      %v215 = vmul.f32 %v210, %v214
      %216 = vst.msk [vmem:[#allocation2] sm:$0x1] %vm204, %v215
      %s217 = scalar_lea.vmem %s0, 8
      %v218 = vld [vmem:[%s217] sm:$0xff]
      %v219 = vsel %vm29, %v218, 0.0
      %v220 = vrot.slane %v219, 4
      %v221 = vadd.f32 %v219, %v220
      %v222 = vrot.slane %v221, 2
      %v223 = vadd.f32 %v221, %v222
      %v224 = vrot.slane %v223, 1
      %v225 = vadd.f32 %v223, %v224
      %v226 = vmul.f32 %v225, %v37
      %s227 = scalar_lea.vmem %s1, 8
      %v228 = vld [vmem:[%s227] sm:$0xff]
      %v229 = vsel %vm29, %v228, 0.0
      %v230 = vrot.slane %v229, 4
      %v231 = vadd.f32 %v229, %v230
      %v232 = vrot.slane %v231, 2
      %v233 = vadd.f32 %v231, %v232
      %v234 = vrot.slane %v233, 1
      %v235 = vadd.f32 %v233, %v234
      %v236 = vmul.f32 %v235, %v37
      %v237 = vld [vmem:[%s2] sm:$0xff]
      %v238 = vld [vmem:[%s2 + $0x8] sm:$0xff]
      %v239 = vld [vmem:[%s2 + $0x10] sm:$0xff]
      %v240 = vld [vmem:[%s2 + $0x18] sm:$0xff]
      %v241 = vld [vmem:[%s3] sm:$0xff]
      %v242 = vld [vmem:[%s3 + $0x8] sm:$0xff]
      %v243 = vld [vmem:[%s3 + $0x10] sm:$0xff]
      %v244 = vld [vmem:[%s3 + $0x18] sm:$0xff]
      %v246 = vsel %vm29, %v236, 0
      %248 = vmatprep.subr.mxu0 0.0
      %249 = vmatpush1.msra.mxu0 %v241
      %250 = vmatprep.subr.mxu0 0.0
      %251 = vmatpush1.msra.mxu0 %v242
      %252 = vmatprep.subr.mxu0 0.0
      %253 = vmatpush1.msra.mxu0 %v243
      %254 = vmatprep.subr.mxu0 0.0
      %255 = vmatpush1.msra.mxu0 %v244
      %256 = vmatprep.subr.mxu0 0.0
      %257 = vmatpush1.msra.mxu0 0.0
      %258 = vmatprep.subr.mxu0 0.0
      %259 = vmatpush1.msra.mxu0 0.0
      %260 = vmatprep.subr.mxu0 0.0
      %261 = vmatpush1.msra.mxu0 0.0
      %262 = vmatprep.subr.mxu0 0.0
      %263 = vmatpush1.msra.mxu0 0.0
      %264 = vmatprep.subr.mxu0 0.0
      %265 = vmatpush1.msra.mxu0 0.0
      %266 = vmatprep.subr.mxu0 0.0
      %267 = vmatpush1.msra.mxu0 0.0
      %268 = vmatprep.subr.mxu0 0.0
      %269 = vmatpush1.msra.mxu0 0.0
      %270 = vmatprep.subr.mxu0 0.0
      %271 = vmatpush1.msra.mxu0 0.0
      %272 = vmatprep.subr.mxu0 0.0
      %273 = vmatpush1.msra.mxu0 0.0
      %274 = vmatprep.subr.mxu0 0.0
      %275 = vmatpush1.msra.mxu0 0.0
      %276 = vmatprep.subr.mxu0 0.0
      %277 = vmatpush1.msra.mxu0 0.0
      %278 = vmatprep.subr.mxu0 0.0
      %279 = vmatpush1.msra.mxu0 0.0
      %280 = vmatprep.subr.mxu0 0.0
      %281 = vmatpush1.msra.mxu0 0.0
      %282 = vmatprep.subr.mxu0 0.0
      %283 = vmatpush1.msra.mxu0 0.0
      %284 = vmatprep.subr.mxu0 0.0
      %285 = vmatpush1.msra.mxu0 0.0
      %286 = vmatprep.subr.mxu0 0.0
      %287 = vmatpush1.msra.mxu0 0.0
      %288 = vmatprep.subr.mxu0 0.0
      %289 = vmatpush1.msra.mxu0 0.0
      %290 = vmatprep.subr.mxu0 0.0
      %291 = vmatpush1.msra.mxu0 0.0
      %292 = vmatprep.subr.mxu0 0.0
      %293 = vmatpush1.msra.mxu0 0.0
      %294 = vmatprep.subr.mxu0 0.0
      %295 = vmatpush1.msra.mxu0 0.0
      %296 = vmatprep.subr.mxu0 0.0
      %297 = vmatpush1.msra.mxu0 0.0
      %298 = vmatprep.subr.mxu0 0.0
      %299 = vmatpush1.msra.mxu0 0.0
      %300 = vmatprep.subr.mxu0 0.0
      %301 = vmatpush1.msra.mxu0 0.0
      %302 = vmatprep.subr.mxu0 0.0
      %303 = vmatpush1.msra.mxu0 0.0
      %304 = vmatprep.subr.mxu0 0.0
      %305 = vmatpush1.msra.mxu0 0.0
      %306 = vmatprep.subr.mxu0 0.0
      %307 = vmatpush1.msra.mxu0 0.0
      %308 = vmatprep.subr.mxu0 0.0
      %309 = vmatpush1.msra.mxu0 0.0
      %310 = vmatprep.subr.mxu0 0.0
      %311 = vmatpush1.msra.mxu0 0.0
      %312 = vmatprep.mubr.f32.mxu0 0.0
      %313 = vmatmul.mubr.f32.gmra.mrb[0].mxu0 %v246
      %v314 = vpop.f32.mrb[0].mxu0
      %v315 = vadd.f32 0.0, %v314
      %v316 = vpop.f32.mrb[0].mxu0
      %317 = vdwg.mxu0
      %v319 = vsel %vm29, %v226, 0
      %321 = vmatprep.subr.mxu0 0.0
      %322 = vmatpush1.msra.mxu0 %v237
      %323 = vmatprep.subr.mxu0 0.0
      %324 = vmatpush1.msra.mxu0 %v238
      %325 = vmatprep.subr.mxu0 0.0
      %326 = vmatpush1.msra.mxu0 %v239
      %327 = vmatprep.subr.mxu0 0.0
      %328 = vmatpush1.msra.mxu0 %v240
      %329 = vmatprep.subr.mxu0 0.0
      %330 = vmatpush1.msra.mxu0 0.0
      %331 = vmatprep.subr.mxu0 0.0
      %332 = vmatpush1.msra.mxu0 0.0
      %333 = vmatprep.subr.mxu0 0.0
      %334 = vmatpush1.msra.mxu0 0.0
      %335 = vmatprep.subr.mxu0 0.0
      %336 = vmatpush1.msra.mxu0 0.0
      %337 = vmatprep.subr.mxu0 0.0
      %338 = vmatpush1.msra.mxu0 0.0
      %339 = vmatprep.subr.mxu0 0.0
      %340 = vmatpush1.msra.mxu0 0.0
      %341 = vmatprep.subr.mxu0 0.0
      %342 = vmatpush1.msra.mxu0 0.0
      %343 = vmatprep.subr.mxu0 0.0
      %344 = vmatpush1.msra.mxu0 0.0
      %345 = vmatprep.subr.mxu0 0.0
      %346 = vmatpush1.msra.mxu0 0.0
      %347 = vmatprep.subr.mxu0 0.0
      %348 = vmatpush1.msra.mxu0 0.0
      %349 = vmatprep.subr.mxu0 0.0
      %350 = vmatpush1.msra.mxu0 0.0
      %351 = vmatprep.subr.mxu0 0.0
      %352 = vmatpush1.msra.mxu0 0.0
      %353 = vmatprep.subr.mxu0 0.0
      %354 = vmatpush1.msra.mxu0 0.0
      %355 = vmatprep.subr.mxu0 0.0
      %356 = vmatpush1.msra.mxu0 0.0
      %357 = vmatprep.subr.mxu0 0.0
      %358 = vmatpush1.msra.mxu0 0.0
      %359 = vmatprep.subr.mxu0 0.0
      %360 = vmatpush1.msra.mxu0 0.0
      %361 = vmatprep.subr.mxu0 0.0
      %362 = vmatpush1.msra.mxu0 0.0
      %363 = vmatprep.subr.mxu0 0.0
      %364 = vmatpush1.msra.mxu0 0.0
      %365 = vmatprep.subr.mxu0 0.0
      %366 = vmatpush1.msra.mxu0 0.0
      %367 = vmatprep.subr.mxu0 0.0
      %368 = vmatpush1.msra.mxu0 0.0
      %369 = vmatprep.subr.mxu0 0.0
      %370 = vmatpush1.msra.mxu0 0.0
      %371 = vmatprep.subr.mxu0 0.0
      %372 = vmatpush1.msra.mxu0 0.0
      %373 = vmatprep.subr.mxu0 0.0
      %374 = vmatpush1.msra.mxu0 0.0
      %375 = vmatprep.subr.mxu0 0.0
      %376 = vmatpush1.msra.mxu0 0.0
      %377 = vmatprep.subr.mxu0 0.0
      %378 = vmatpush1.msra.mxu0 0.0
      %379 = vmatprep.subr.mxu0 0.0
      %380 = vmatpush1.msra.mxu0 0.0
      %381 = vmatprep.subr.mxu0 0.0
      %382 = vmatpush1.msra.mxu0 0.0
      %383 = vmatprep.subr.mxu0 0.0
      %384 = vmatpush1.msra.mxu0 0.0
      %385 = vmatprep.mubr.f32.mxu0 0.0
      %386 = vmatmul.mubr.f32.gmra.mrb[0].mxu0 %v319
      %v387 = vpop.f32.mrb[0].mxu0
      %v388 = vadd.f32 %v315, %v387
      %v389 = vpop.f32.mrb[0].mxu0
      %390 = vdwg.mxu0
      %v391 = vld [vmem:[%s4] sm:$0x1]
      %v392 = vadd.f32 %v388, %v391
      %v393 = vsel %vm204, %v392, -inf
      %394 = vmax.xlane.f32.xlu0 %v393
      %v395 = vpop.xlane.xlu0 %394
      %v396 = vsub.f32 %v392, %v395
      %v397 = vmul.f32 %v396, 1.442695
      %v398 = vpow.pop %v397
      %v399 = vsel %vm204, %v398, 0.0
      %400 = vadd.xlane.f32.xlu0 %v399
      %v401 = vpop.xlane.xlu0 %400
      %v402 = vrcp.pop %v401
      %v403 = vmul.f32 %v398, %v402
      %s404 = scalar_lea.vmem [#allocation2], 1
      %405 = vst.msk [vmem:[%s404] sm:$0x1] %vm204, %v403
    $region29: #{tpu_custom_call.1} parent=1 // pred_fallthru
      _
    %v406 = vld [vmem:[#allocation2] sm:$0x1]
    %v407 = vld [vmem:[%s5] sm:$0x1f]
    %v408 = vld [vmem:[%s5 + $0x8] sm:$0x1f]
    %vm409 = vcmask 39936
    %v411 = vsel %vm409, %v406, 0
    %vm413 = vcmask 1044480
    %v415 = vsel %vm413, %v407, 0
    %v418 = vsel %vm413, %v408, 0
    %420 = vmatprep.subr.mxu0 %v418
    %421 = vmatpush1.msra.mxu0 %v415
    %422 = vmatprep.subr.mxu0 0.0
    %423 = vmatpush1.msra.mxu0 0.0
    %424 = vmatprep.subr.mxu0 0.0
    %425 = vmatpush1.msra.mxu0 0.0
    %426 = vmatprep.subr.mxu0 0.0
    %427 = vmatpush1.msra.mxu0 0.0
    %428 = vmatprep.subr.mxu0 0.0
    %429 = vmatpush1.msra.mxu0 0.0
    %430 = vmatprep.subr.mxu0 0.0
    %431 = vmatpush1.msra.mxu0 0.0
    %432 = vmatprep.subr.mxu0 0.0
    %433 = vmatpush1.msra.mxu0 0.0
    %434 = vmatprep.subr.mxu0 0.0
    %435 = vmatpush1.msra.mxu0 0.0
    %436 = vmatprep.subr.mxu0 0.0
    %437 = vmatpush1.msra.mxu0 0.0
    %438 = vmatprep.subr.mxu0 0.0
    %439 = vmatpush1.msra.mxu0 0.0
    %440 = vmatprep.subr.mxu0 0.0
    %441 = vmatpush1.msra.mxu0 0.0
    %442 = vmatprep.subr.mxu0 0.0
    %443 = vmatpush1.msra.mxu0 0.0
    %444 = vmatprep.subr.mxu0 0.0
    %445 = vmatpush1.msra.mxu0 0.0
    %446 = vmatprep.subr.mxu0 0.0
    %447 = vmatpush1.msra.mxu0 0.0
    %448 = vmatprep.subr.mxu0 0.0
    %449 = vmatpush1.msra.mxu0 0.0
    %450 = vmatprep.subr.mxu0 0.0
    %451 = vmatpush1.msra.mxu0 0.0
    %452 = vmatprep.subr.mxu0 0.0
    %453 = vmatpush1.msra.mxu0 0.0
    %454 = vmatprep.subr.mxu0 0.0
    %455 = vmatpush1.msra.mxu0 0.0
    %456 = vmatprep.subr.mxu0 0.0
    %457 = vmatpush1.msra.mxu0 0.0
    %458 = vmatprep.subr.mxu0 0.0
    %459 = vmatpush1.msra.mxu0 0.0
    %460 = vmatprep.subr.mxu0 0.0
    %461 = vmatpush1.msra.mxu0 0.0
    %462 = vmatprep.subr.mxu0 0.0
    %463 = vmatpush1.msra.mxu0 0.0
    %464 = vmatprep.subr.mxu0 0.0
    %465 = vmatpush1.msra.mxu0 0.0
    %466 = vmatprep.subr.mxu0 0.0
    %467 = vmatpush1.msra.mxu0 0.0
    %468 = vmatprep.subr.mxu0 0.0
    %469 = vmatpush1.msra.mxu0 0.0
    %470 = vmatprep.subr.mxu0 0.0
    %471 = vmatpush1.msra.mxu0 0.0
    %472 = vmatprep.subr.mxu0 0.0
    %473 = vmatpush1.msra.mxu0 0.0
    %474 = vmatprep.subr.mxu0 0.0
    %475 = vmatpush1.msra.mxu0 0.0
    %476 = vmatprep.subr.mxu0 0.0
    %477 = vmatpush1.msra.mxu0 0.0
    %478 = vmatprep.subr.mxu0 0.0
    %479 = vmatpush1.msra.mxu0 0.0
    %480 = vmatprep.subr.mxu0 0.0
    %481 = vmatpush1.msra.mxu0 0.0
    %482 = vmatprep.subr.mxu0 0.0
    %483 = vmatpush1.msra.mxu0 0.0
    %484 = vmatprep.mubr.f32.mxu0 0.0
    %485 = vmatmul.mubr.f32.gmra.mrb[0].mxu0 %v411
    %v486 = vpop.f32.mrb[0].mxu0
    %v487 = vadd.f32 0.0, %v486
    %v488 = vpop.f32.mrb[0].mxu0
    %v489 = vadd.f32 0.0, %v488
    %490 = vdwg.mxu0
    %v493 = vcombine.low %v487, %v489
    %v495 = vunpack.c.l.s4 1966171168
    %v496 = vunpack.c.0.s8 %v495
    %v497 = vlaneseq
    %v498 = vshrl.u32 %v497, 7
    %v499 = vsub.s32 %v496, %v498
    %v500 = vrot.slane %v493, %v499
    %v502 = vunpack.c.l.s4 1966171168
    %v503 = vunpack.c.0.s8 %v502
    %v504 = vlaneseq
    %v505 = vshrl.u32 %v504, 7
    %v506 = vsub.s32 %v503, %v505
    %v507 = vrot.slane %v500, %v506
    %v509 = vlaneseq
    %vm510 = vcmp.ge.s32.totalorder %v509, 0
    %vm511 = vcmp.lt.s32.totalorder %v509, 256
    %vm512 = vmand %vm510, %vm511
    %513 = vst.msk [vmem:[#allocation3] sm:$0x3] %vm512, %v507
    %s514 = scalar_lea.vmem [#allocation2], 1
    %v515 = vld [vmem:[%s514] sm:$0x1]
    %s516 = scalar_lea.vmem %s5, 16
    %v517 = vld [vmem:[%s516] sm:$0x1f]
    %v518 = vld [vmem:[%s516 + $0x8] sm:$0x1f]
    %v520 = vsel %vm409, %v515, 0
    %v523 = vsel %vm413, %v517, 0
    %v526 = vsel %vm413, %v518, 0
    %528 = vmatprep.subr.mxu0 %v526
    %529 = vmatpush1.msra.mxu0 %v523
    %530 = vmatprep.subr.mxu0 0.0
    %531 = vmatpush1.msra.mxu0 0.0
    %532 = vmatprep.subr.mxu0 0.0
    %533 = vmatpush1.msra.mxu0 0.0
    %534 = vmatprep.subr.mxu0 0.0
    %535 = vmatpush1.msra.mxu0 0.0
    %536 = vmatprep.subr.mxu0 0.0
    %537 = vmatpush1.msra.mxu0 0.0
    %538 = vmatprep.subr.mxu0 0.0
    %539 = vmatpush1.msra.mxu0 0.0
    %540 = vmatprep.subr.mxu0 0.0
    %541 = vmatpush1.msra.mxu0 0.0
    %542 = vmatprep.subr.mxu0 0.0
    %543 = vmatpush1.msra.mxu0 0.0
    %544 = vmatprep.subr.mxu0 0.0
    %545 = vmatpush1.msra.mxu0 0.0
    %546 = vmatprep.subr.mxu0 0.0
    %547 = vmatpush1.msra.mxu0 0.0
    %548 = vmatprep.subr.mxu0 0.0
    %549 = vmatpush1.msra.mxu0 0.0
    %550 = vmatprep.subr.mxu0 0.0
    %551 = vmatpush1.msra.mxu0 0.0
    %552 = vmatprep.subr.mxu0 0.0
    %553 = vmatpush1.msra.mxu0 0.0
    %554 = vmatprep.subr.mxu0 0.0
    %555 = vmatpush1.msra.mxu0 0.0
    %556 = vmatprep.subr.mxu0 0.0
    %557 = vmatpush1.msra.mxu0 0.0
    %558 = vmatprep.subr.mxu0 0.0
    %559 = vmatpush1.msra.mxu0 0.0
    %560 = vmatprep.subr.mxu0 0.0
    %561 = vmatpush1.msra.mxu0 0.0
    %562 = vmatprep.subr.mxu0 0.0
    %563 = vmatpush1.msra.mxu0 0.0
    %564 = vmatprep.subr.mxu0 0.0
    %565 = vmatpush1.msra.mxu0 0.0
    %566 = vmatprep.subr.mxu0 0.0
    %567 = vmatpush1.msra.mxu0 0.0
    %568 = vmatprep.subr.mxu0 0.0
    %569 = vmatpush1.msra.mxu0 0.0
    %570 = vmatprep.subr.mxu0 0.0
    %571 = vmatpush1.msra.mxu0 0.0
    %572 = vmatprep.subr.mxu0 0.0
    %573 = vmatpush1.msra.mxu0 0.0
    %574 = vmatprep.subr.mxu0 0.0
    %575 = vmatpush1.msra.mxu0 0.0
    %576 = vmatprep.subr.mxu0 0.0
    %577 = vmatpush1.msra.mxu0 0.0
    %578 = vmatprep.subr.mxu0 0.0
    %579 = vmatpush1.msra.mxu0 0.0
    %580 = vmatprep.subr.mxu0 0.0
    %581 = vmatpush1.msra.mxu0 0.0
    %582 = vmatprep.subr.mxu0 0.0
    %583 = vmatpush1.msra.mxu0 0.0
    %584 = vmatprep.subr.mxu0 0.0
    %585 = vmatpush1.msra.mxu0 0.0
    %586 = vmatprep.subr.mxu0 0.0
    %587 = vmatpush1.msra.mxu0 0.0
    %588 = vmatprep.subr.mxu0 0.0
    %589 = vmatpush1.msra.mxu0 0.0
    %590 = vmatprep.subr.mxu0 0.0
    %591 = vmatpush1.msra.mxu0 0.0
    %592 = vmatprep.mubr.f32.mxu0 0.0
    %593 = vmatmul.mubr.f32.gmra.mrb[0].mxu0 %v520
    %v594 = vpop.f32.mrb[0].mxu0
    %v595 = vadd.f32 0.0, %v594
    %v596 = vpop.f32.mrb[0].mxu0
    %v597 = vadd.f32 0.0, %v596
    %598 = vdwg.mxu0
    %v601 = vcombine.low %v595, %v597
    %v603 = vunpack.c.l.s4 1966171168
    %v604 = vunpack.c.0.s8 %v603
    %v605 = vlaneseq
    %v606 = vshrl.u32 %v605, 7
    %v607 = vsub.s32 %v604, %v606
    %v608 = vrot.slane %v601, %v607
    %v610 = vunpack.c.l.s4 1966171168
    %v611 = vunpack.c.0.s8 %v610
    %v612 = vlaneseq
    %v613 = vshrl.u32 %v612, 7
    %v614 = vsub.s32 %v611, %v613
    %v615 = vrot.slane %v608, %v614
    %s617 = scalar_lea.vmem [#allocation3], 2
    %618 = vst.msk [vmem:[%s617] sm:$0x3] %vm512, %v615
    // Predicated region
    $region30: #{tpu_custom_call.1} parent=1 // pred_check
      _
    $region31: #{tpu_custom_call.1} parent=1 // pred_check_branch
      %620 = sbr.rel (0) target = $region33
    $region32: #{tpu_custom_call.1} parent=1 // pred_region
      %s622 = ssub.s32 64, 64
      %623 = vsyncadd [#allocation4], %s622
      %s624 = sshll.u32 [#allocation3], 4
      %s625 = int_to_ptr.vmem [resolvable:$true] %s624
      %630 = dma.vmem_to_hbm [thread:$0]  %s625, 64, %s6, [#allocation4], 32, 32, 2
    $region33: #{tpu_custom_call.1} parent=1 // pred_fallthru
      _
    // Predicated region
    $region34: #{tpu_custom_call.1} parent=1 // pred_check
      _
    $region35: #{tpu_custom_call.1} parent=1 // pred_check_branch
      %632 = sbr.rel (0) target = $region37
    $region36: #{tpu_custom_call.1} parent=1 // pred_region
      %633 = dma.done [#allocation4], 64
    $region37: #{tpu_custom_call.1} parent=1 // pred_fallthru
      _
    %634 = vsyncpa [#allocation4], 1

</llo_original>
